<compile_context>
chip_gen: v7x
topology: tpu7x:2x2x1
jax: 0.10.0
libtpu: 0.0.40
codegen_flags: <defaults>
</compile_context>

<pallas_src>
import functools

import jax
import jax.numpy as jnp
from jax.experimental import pallas as pl
from jax.experimental.pallas import tpu as pltpu

_FEAT = 14            # layer1 fan-in
_GRP = 64             # batch rows packed into one lane-dense group row
_K = _GRP * _FEAT     # 896 = 7 * 128 lanes per group row


def _round_up(a, m):
    return -(-a // m) * m


def _mlp_group_kernel(xg_ref, s_ref, b_ref, o_ref):
    # xg_ref: (TBG, 896) -- TBG groups of 64 batch rows, flattened row-major
    # s_ref:  (896, 64)  -- segment matrix with w_eff folded in (grid-invariant)
    # b_ref:  (1, 1)     -- collapsed bias scalar (SMEM)
    # o_ref:  (TBG, 64)  -- 64 sigmoid outputs per group row
    y = jnp.dot(xg_ref[...], s_ref[...], preferred_element_type=jnp.float32)
    o_ref[...] = jax.nn.sigmoid(y + b_ref[0, 0]).astype(o_ref.dtype)


@functools.partial(jax.jit, static_argnames=("tb",))
def mlp_forward(x, params, *, tb=65536):
    """x: (B, 14) float32. params: {layerN: (weight, bias)} in PyTorch
    (out, in) / (out,) layout. Returns (B, 1) float32 = sigmoid(l3(l2(l1(x))))."""
    (w1, b1), (w2, b2), (w3, b3) = params["layer1"], params["layer2"], params["layer3"]

    # Exact collapse of the activation-free Linear stack (module has no ReLU/GELU).
    w_eff = (w1.T @ w2.T @ w3.T).astype(jnp.float32).reshape(_FEAT)        # (14,)
    b_eff = ((b1 @ w2.T + b2) @ w3.T + b3).astype(jnp.float32).reshape(1, 1)

    # Fold w_eff into the per-group segment-sum matrix S (896, 64).
    p = jnp.arange(_K)
    seg = (p[:, None] // _FEAT) == jnp.arange(_GRP)[None, :]
    s_mat = jnp.where(seg, w_eff[p % _FEAT][:, None], 0.0).astype(jnp.float32)

    B, F = x.shape
    assert F == _FEAT, f"expected {_FEAT} input features, got {F}"
    x = x.astype(jnp.float32)
    # TODO(synk): optionally accept/cast x as bf16 (f32 accumulate in-kernel)
    # to halve the HBM read if the caller's numerics allow it.

    rem = B % _GRP
    if rem:
        # Ragged batch: the only case that copies x (pad to the next group).
        x = jnp.pad(x, ((0, _GRP - rem), (0, 0)))
    G = x.shape[0] // _GRP
    xg = x.reshape(G, _K)  # pure row-major relabeling -> bitcast, no HBM traffic

    # Tile size in groups: large enough to amortize ~0.35 us/step overhead,
    # small enough to keep >= 4 grid steps (v7x 2-TC sharding) and to keep the
    # double-buffered VMEM footprint ~< 9 MiB on every generation.
    tbg_cap = max(8, tb // _GRP)                       # default 1024 groups = 64K rows
    tbg = min(tbg_cap, _round_up(pl.cdiv(G, 4), 8))
    tbg = min(max(tbg, 8), G)                          # block dim must be %8 or == full dim
    grid = (pl.cdiv(G, tbg),)

    out = pl.pallas_call(
        _mlp_group_kernel,
        out_shape=jax.ShapeDtypeStruct((G, _GRP), jnp.float32),
        grid=grid,
        in_specs=[
            pl.BlockSpec((tbg, _K), lambda i: (i, 0)),            # x tile (lane-dense)
            pl.BlockSpec((_K, _GRP), lambda i: (0, 0)),           # S, VMEM-resident
            pl.BlockSpec(memory_space=pltpu.MemorySpace.SMEM),    # bias scalar
        ],
        out_specs=pl.BlockSpec((tbg, _GRP), lambda i: (i, 0)),
        compiler_params=pltpu.CompilerParams(
            dimension_semantics=("parallel",),     # shard batch grid over v7x's 2 TCs
            vmem_limit_bytes=32 * 1024 * 1024,     # explicit budget; peak use ~8.5 MiB
        ),
    )(xg, s_mat, b_eff)

    # (G, 64) -> (G*64,) is a free reshape; slice drops the (tiny) padded tail.
    return out.reshape(G * _GRP)[:B].reshape(B, 1)


def init_params(key):
    """Deterministic params matching nn.Linear shapes (out, in) / (out,)."""
    shapes = {
        "layer1": ((32, 14), (32,)),
        "layer2": ((16, 32), (16,)),
        "layer3": ((1, 16), (1,)),
    }
    params = {}
    for name, (wshape, bshape) in shapes.items():
        key, kw, kb = jax.random.split(key, 3)
        bound = 1.0 / (wshape[1] ** 0.5)  # PyTorch-style uniform bound
        w = jax.random.uniform(kw, wshape, jnp.float32, -bound, bound)
        b = jax.random.uniform(kb, bshape, jnp.float32, -bound, bound)
        params[name] = (w, b)
    return params


def mlp_reference(x, params):
    """Layer-by-layer reference matching the original PyTorch forward."""
    (w1, b1), (w2, b2), (w3, b3) = params["layer1"], params["layer2"], params["layer3"]
    y = x @ w1.T + b1
    y = y @ w2.T + b2
    y = y @ w3.T + b3
    return jax.nn.sigmoid(y)


if __name__ == "__main__":
    key = jax.random.PRNGKey(0)
    key, kp = jax.random.split(key)
    params = init_params(kp)

    # tiny (padded, single block) / ragged (B%64!=0) / aligned multi-block
    # (partial last block: G=13 groups, tile=8 groups).
    for name, batch in (("tiny", 8), ("ragged", 300), ("aligned", 832)):
        key, kx = jax.random.split(key)
        x = jax.random.normal(kx, (batch, _FEAT), jnp.float32)
        out = jax.block_until_ready(mlp_forward(x, params))
        ref = mlp_reference(x, params)
        assert out.shape == (batch, 1), (name, out.shape)
        assert jnp.allclose(out, ref, atol=2e-5, rtol=1e-5), name

    print("KERNEL_OK")
</pallas_src>

<mosaic_0001>
module attributes {stable_mosaic.version = 11 : i64} {
  func.func @_mlp_group_kernel(%arg0: i32, %arg1: memref<1x896xf32, #tpu.memory_space<vmem>>, %arg2: memref<896x64xf32, #tpu.memory_space<vmem>>, %arg3: memref<1x1xf32, #tpu.memory_space<smem>>, %arg4: memref<1x64xf32, #tpu.memory_space<vmem>>) attributes {dimension_semantics = [#tpu.dimension_semantics<parallel>], iteration_bounds = array<i64: 1>, scalar_prefetch = 0 : i64, scratch_operands = 0 : i64, tpu.core_type = #tpu.core_type<tc>, window_params = [{transform_indices = @transform_0, window_bounds = array<i64: 1, 896>}, {pipeline_mode = #tpu.pipeline_mode<synchronous>, transform_indices = @transform_1, window_bounds = array<i64: 896, 64>}, {transform_indices = @transform_2, window_bounds = array<i64: 1, 1>}, {transform_indices = @transform_3, window_bounds = array<i64: 1, 64>}]} {
    %c0 = arith.constant 0 : index
    %c0_0 = arith.constant 0 : index
    %0 = vector.load %arg1[%c0, %c0_0] : memref<1x896xf32, #tpu.memory_space<vmem>>, vector<1x896xf32>
    %c0_1 = arith.constant 0 : index
    %c0_2 = arith.constant 0 : index
    %1 = vector.load %arg2[%c0_1, %c0_2] : memref<896x64xf32, #tpu.memory_space<vmem>>, vector<896x64xf32>
    %cst = arith.constant dense<0.000000e+00> : vector<1x64xf32>
    %2 = tpu.matmul %0, %1, %cst {dimension_numbers = #tpu.dot_dimension_numbers<[1], [0], [0], [1], [0, 0, 1, 1], [], []>} : vector<1x896xf32>, vector<896x64xf32>, vector<1x64xf32> -> vector<1x64xf32>
    %c0_3 = arith.constant 0 : index
    %c0_4 = arith.constant 0 : index
    %3 = memref.load %arg3[%c0_3, %c0_4] : memref<1x1xf32, #tpu.memory_space<smem>>
    %4 = vector.broadcast %3 : f32 to vector<1x64xf32>
    %5 = arith.addf %2, %4 : vector<1x64xf32>
    %6 = arith.negf %5 : vector<1x64xf32>
    %7 = math.exp %6 : vector<1x64xf32>
    %cst_5 = arith.constant 1.000000e+00 : f32
    %8 = vector.broadcast %cst_5 : f32 to vector<1x64xf32>
    %9 = arith.addf %8, %7 : vector<1x64xf32>
    %10 = arith.divf %8, %9 : vector<1x64xf32>
    %c0_6 = arith.constant 0 : index
    %c0_7 = arith.constant 0 : index
    %11 = vector.load %arg4[%c0_6, %c0_7] : memref<1x64xf32, #tpu.memory_space<vmem>>, vector<1x64xf32>
    tpu.vector_store %arg4[%c0_6, %c0_7], %10 {strides = array<i32>} : memref<1x64xf32, #tpu.memory_space<vmem>>, vector<1x64xf32>,
    return
  }
  func.func @transform_0(%arg0: i32) -> (i32, i32) {
    %c0_i32 = arith.constant 0 : i32
    %c0_i32_0 = arith.constant 0 : i32
    return %arg0, %c0_i32 : i32, i32
  }
  func.func @transform_1(%arg0: i32) -> (i32, i32) {
    %c0_i32 = arith.constant 0 : i32
    %c0_i32_0 = arith.constant 0 : i32
    %c0_i32_1 = arith.constant 0 : i32
    return %c0_i32, %c0_i32_0 : i32, i32
  }
  func.func @transform_2(%arg0: i32) -> (i32, i32) {
    %c0_i32 = arith.constant 0 : i32
    %c0_i32_0 = arith.constant 0 : i32
    %c0_i32_1 = arith.constant 0 : i32
    return %c0_i32, %c0_i32_0 : i32, i32
  }
  func.func @transform_3(%arg0: i32) -> (i32, i32) {
    %c0_i32 = arith.constant 0 : i32
    %c0_i32_0 = arith.constant 0 : i32
    return %arg0, %c0_i32 : i32, i32
  }
}

</mosaic_0001>

<llo_original>
// kernel: mlp_forward.1
$region0: #{mlp_forward.1}
  #allocation0 [shape = 'u32[]', space=smem, size = 0x4, offset = 0x4, fixed_abs, tag = 'smem constant byte address 0x4 - core index']
  #allocation1 [shape = 'u32[144,128]{1,0:T(1,128)}', space=vmem, size = 0x12000, scoped, tag = 'internal scratch']
  #allocation2 [shape = 'f32[1,1]{1,0:T(1,128)S(6)}', space=smem, size = 0x200, scoped, tag = 'scoped memory for mlp_forward.1']
  %s0 = inlined_call_operand.vmem [shape: f32[1,896], index: 0, kind: input, shape index: {}]
  %s1 = inlined_call_operand.vmem [shape: f32[896,64], index: 1, kind: input, shape index: {}]
  %s2 = inlined_call_operand.<no memory space> [shape: f32[1,1], index: 2, kind: input, shape index: {}]
  %s3 = inlined_call_operand.vmem [shape: f32[1,64], index: 3, kind: output, shape index: {}]
  %s4 = sld [smem:[#allocation0]]
  $region22: #{mlp_forward.1} parent=0
    _
  %s6 = ssub.s32 1, %s4
  %s7 = scalar_select 0, %s6, %s4
  %8 = sst [smem:[#allocation2]] %s2
  // Predicated region
  $region2: #{mlp_forward.1} parent=0 // pred_check
    _
  $region3: #{mlp_forward.1} parent=0 // pred_check_branch
    %10 = sbr.rel (0) target = $region5
  $region4: #{mlp_forward.1} parent=0 // pred_region
    _
  $region5: #{mlp_forward.1} parent=0 // pred_fallthru
    _
  // Predicated region
  $region6: #{mlp_forward.1} parent=0 // pred_check
    _
  $region7: #{mlp_forward.1} parent=0 // pred_check_branch
    %12 = sbr.rel (0) target = $region9
  $region8: #{mlp_forward.1} parent=0 // pred_region
    _
  $region9: #{mlp_forward.1} parent=0 // pred_fallthru
    _
  // Predicated region
  $region10: #{mlp_forward.1} parent=0 // pred_check
    _
  $region11: #{mlp_forward.1} parent=0 // pred_check_branch
    %14 = sbr.rel (0) target = $region13
  $region12: #{mlp_forward.1} parent=0 // pred_region
    _
  $region13: #{mlp_forward.1} parent=0 // pred_fallthru
    _
  %v15 = vld [vmem:[%s0] sm:$0xff]
  %v16 = vld [vmem:[%s1] sm:$0xff]
  %v17 = vld [vmem:[%s1 + $0x8] sm:$0xff]
  %v18 = vld [vmem:[%s1 + $0x10] sm:$0xff]
  %v19 = vld [vmem:[%s1 + $0x18] sm:$0xff]
  %v20 = vld [vmem:[%s1 + $0x20] sm:$0xff]
  %v21 = vld [vmem:[%s1 + $0x28] sm:$0xff]
  %v22 = vld [vmem:[%s1 + $0x30] sm:$0xff]
  %v23 = vld [vmem:[%s1 + $0x38] sm:$0xff]
  %v24 = vld [vmem:[%s1 + $0x40] sm:$0xff]
  %v25 = vld [vmem:[%s1 + $0x48] sm:$0xff]
  %v26 = vld [vmem:[%s1 + $0x50] sm:$0xff]
  %v27 = vld [vmem:[%s1 + $0x58] sm:$0xff]
  %v28 = vld [vmem:[%s1 + $0x60] sm:$0xff]
  %v29 = vld [vmem:[%s1 + $0x68] sm:$0xff]
  %v30 = vld [vmem:[%s1 + $0x70] sm:$0xff]
  %v31 = vld [vmem:[%s1 + $0x78] sm:$0xff]
  %v32 = vld [vmem:[%s1 + $0x80] sm:$0xff]
  %v33 = vld [vmem:[%s1 + $0x88] sm:$0xff]
  %v34 = vld [vmem:[%s1 + $0x90] sm:$0xff]
  %v35 = vld [vmem:[%s1 + $0x98] sm:$0xff]
  %v36 = vld [vmem:[%s1 + $0xa0] sm:$0xff]
  %v37 = vld [vmem:[%s1 + $0xa8] sm:$0xff]
  %v38 = vld [vmem:[%s1 + $0xb0] sm:$0xff]
  %v39 = vld [vmem:[%s1 + $0xb8] sm:$0xff]
  %v40 = vld [vmem:[%s1 + $0xc0] sm:$0xff]
  %v41 = vld [vmem:[%s1 + $0xc8] sm:$0xff]
  %v42 = vld [vmem:[%s1 + $0xd0] sm:$0xff]
  %v43 = vld [vmem:[%s1 + $0xd8] sm:$0xff]
  %v44 = vld [vmem:[%s1 + $0xe0] sm:$0xff]
  %v45 = vld [vmem:[%s1 + $0xe8] sm:$0xff]
  %v46 = vld [vmem:[%s1 + $0xf0] sm:$0xff]
  %v47 = vld [vmem:[%s1 + $0xf8] sm:$0xff]
  %v48 = vld [vmem:[%s1 + $0x100] sm:$0xff]
  %v49 = vld [vmem:[%s1 + $0x108] sm:$0xff]
  %v50 = vld [vmem:[%s1 + $0x110] sm:$0xff]
  %v51 = vld [vmem:[%s1 + $0x118] sm:$0xff]
  %v52 = vld [vmem:[%s1 + $0x120] sm:$0xff]
  %v53 = vld [vmem:[%s1 + $0x128] sm:$0xff]
  %v54 = vld [vmem:[%s1 + $0x130] sm:$0xff]
  %v55 = vld [vmem:[%s1 + $0x138] sm:$0xff]
  %v56 = vld [vmem:[%s1 + $0x140] sm:$0xff]
  %v57 = vld [vmem:[%s1 + $0x148] sm:$0xff]
  %v58 = vld [vmem:[%s1 + $0x150] sm:$0xff]
  %v59 = vld [vmem:[%s1 + $0x158] sm:$0xff]
  %v60 = vld [vmem:[%s1 + $0x160] sm:$0xff]
  %v61 = vld [vmem:[%s1 + $0x168] sm:$0xff]
  %v62 = vld [vmem:[%s1 + $0x170] sm:$0xff]
  %v63 = vld [vmem:[%s1 + $0x178] sm:$0xff]
  %v64 = vld [vmem:[%s1 + $0x180] sm:$0xff]
  %v65 = vld [vmem:[%s1 + $0x188] sm:$0xff]
  %v66 = vld [vmem:[%s1 + $0x190] sm:$0xff]
  %v67 = vld [vmem:[%s1 + $0x198] sm:$0xff]
  %v68 = vld [vmem:[%s1 + $0x1a0] sm:$0xff]
  %v69 = vld [vmem:[%s1 + $0x1a8] sm:$0xff]
  %v70 = vld [vmem:[%s1 + $0x1b0] sm:$0xff]
  %v71 = vld [vmem:[%s1 + $0x1b8] sm:$0xff]
  %v72 = vld [vmem:[%s1 + $0x1c0] sm:$0xff]
  %v73 = vld [vmem:[%s1 + $0x1c8] sm:$0xff]
  %v74 = vld [vmem:[%s1 + $0x1d0] sm:$0xff]
  %v75 = vld [vmem:[%s1 + $0x1d8] sm:$0xff]
  %v76 = vld [vmem:[%s1 + $0x1e0] sm:$0xff]
  %v77 = vld [vmem:[%s1 + $0x1e8] sm:$0xff]
  %v78 = vld [vmem:[%s1 + $0x1f0] sm:$0xff]
  %v79 = vld [vmem:[%s1 + $0x1f8] sm:$0xff]
  %v80 = vld [vmem:[%s1 + $0x200] sm:$0xff]
  %v81 = vld [vmem:[%s1 + $0x208] sm:$0xff]
  %v82 = vld [vmem:[%s1 + $0x210] sm:$0xff]
  %v83 = vld [vmem:[%s1 + $0x218] sm:$0xff]
  %v84 = vld [vmem:[%s1 + $0x220] sm:$0xff]
  %v85 = vld [vmem:[%s1 + $0x228] sm:$0xff]
  %v86 = vld [vmem:[%s1 + $0x230] sm:$0xff]
  %v87 = vld [vmem:[%s1 + $0x238] sm:$0xff]
  %v88 = vld [vmem:[%s1 + $0x240] sm:$0xff]
  %v89 = vld [vmem:[%s1 + $0x248] sm:$0xff]
  %v90 = vld [vmem:[%s1 + $0x250] sm:$0xff]
  %v91 = vld [vmem:[%s1 + $0x258] sm:$0xff]
  %v92 = vld [vmem:[%s1 + $0x260] sm:$0xff]
  %v93 = vld [vmem:[%s1 + $0x268] sm:$0xff]
  %v94 = vld [vmem:[%s1 + $0x270] sm:$0xff]
  %v95 = vld [vmem:[%s1 + $0x278] sm:$0xff]
  %v96 = vld [vmem:[%s1 + $0x280] sm:$0xff]
  %v97 = vld [vmem:[%s1 + $0x288] sm:$0xff]
  %v98 = vld [vmem:[%s1 + $0x290] sm:$0xff]
  %v99 = vld [vmem:[%s1 + $0x298] sm:$0xff]
  %v100 = vld [vmem:[%s1 + $0x2a0] sm:$0xff]
  %v101 = vld [vmem:[%s1 + $0x2a8] sm:$0xff]
  %v102 = vld [vmem:[%s1 + $0x2b0] sm:$0xff]
  %v103 = vld [vmem:[%s1 + $0x2b8] sm:$0xff]
  %v104 = vld [vmem:[%s1 + $0x2c0] sm:$0xff]
  %v105 = vld [vmem:[%s1 + $0x2c8] sm:$0xff]
  %v106 = vld [vmem:[%s1 + $0x2d0] sm:$0xff]
  %v107 = vld [vmem:[%s1 + $0x2d8] sm:$0xff]
  %v108 = vld [vmem:[%s1 + $0x2e0] sm:$0xff]
  %v109 = vld [vmem:[%s1 + $0x2e8] sm:$0xff]
  %v110 = vld [vmem:[%s1 + $0x2f0] sm:$0xff]
  %v111 = vld [vmem:[%s1 + $0x2f8] sm:$0xff]
  %v112 = vld [vmem:[%s1 + $0x300] sm:$0xff]
  %v113 = vld [vmem:[%s1 + $0x308] sm:$0xff]
  %v114 = vld [vmem:[%s1 + $0x310] sm:$0xff]
  %v115 = vld [vmem:[%s1 + $0x318] sm:$0xff]
  %v116 = vld [vmem:[%s1 + $0x320] sm:$0xff]
  %v117 = vld [vmem:[%s1 + $0x328] sm:$0xff]
  %v118 = vld [vmem:[%s1 + $0x330] sm:$0xff]
  %v119 = vld [vmem:[%s1 + $0x338] sm:$0xff]
  %v120 = vld [vmem:[%s1 + $0x340] sm:$0xff]
  %v121 = vld [vmem:[%s1 + $0x348] sm:$0xff]
  %v122 = vld [vmem:[%s1 + $0x350] sm:$0xff]
  %v123 = vld [vmem:[%s1 + $0x358] sm:$0xff]
  %v124 = vld [vmem:[%s1 + $0x360] sm:$0xff]
  %v125 = vld [vmem:[%s1 + $0x368] sm:$0xff]
  %v126 = vld [vmem:[%s1 + $0x370] sm:$0xff]
  %v127 = vld [vmem:[%s1 + $0x378] sm:$0xff]
  %s128 = sld [smem:[#allocation2]]
  %v129 = vstv %s128
  %v131 = vlaneseq
  %v132 = vshrl.u32 %v131, 7
  %v133 = vsub.s32 0, %v132
  %v134 = vrot.slane %v15, %v133
  %v135 = vlaneseq
  %v136 = vshrl.u32 %v135, 7
  %v137 = vsub.s32 1, %v136
  %v138 = vrot.slane %v15, %v137
  %v139 = vlaneseq
  %v140 = vshrl.u32 %v139, 7
  %v141 = vsub.s32 2, %v140
  %v142 = vrot.slane %v15, %v141
  %v143 = vlaneseq
  %v144 = vshrl.u32 %v143, 7
  %v145 = vsub.s32 3, %v144
  %v146 = vrot.slane %v15, %v145
  %v147 = vlaneseq
  %v148 = vshrl.u32 %v147, 7
  %v149 = vsub.s32 4, %v148
  %v150 = vrot.slane %v15, %v149
  %v151 = vlaneseq
  %v152 = vshrl.u32 %v151, 7
  %v153 = vsub.s32 5, %v152
  %v154 = vrot.slane %v15, %v153
  %v155 = vlaneseq
  %v156 = vshrl.u32 %v155, 7
  %v157 = vsub.s32 6, %v156
  %v158 = vrot.slane %v15, %v157
  %166 = vmatprep.subr.mxu0 0.0
  %167 = vmatpush1.msra.mxu0 %v16
  %168 = vmatprep.subr.mxu0 0.0
  %169 = vmatpush1.msra.mxu0 %v17
  %170 = vmatprep.subr.mxu0 0.0
  %171 = vmatpush1.msra.mxu0 %v18
  %172 = vmatprep.subr.mxu0 0.0
  %173 = vmatpush1.msra.mxu0 %v19
  %174 = vmatprep.subr.mxu0 0.0
  %175 = vmatpush1.msra.mxu0 %v20
  %176 = vmatprep.subr.mxu0 0.0
  %177 = vmatpush1.msra.mxu0 %v21
  %178 = vmatprep.subr.mxu0 0.0
  %179 = vmatpush1.msra.mxu0 %v22
  %180 = vmatprep.subr.mxu0 0.0
  %181 = vmatpush1.msra.mxu0 %v23
  %182 = vmatprep.subr.mxu0 0.0
  %183 = vmatpush1.msra.mxu0 %v24
  %184 = vmatprep.subr.mxu0 0.0
  %185 = vmatpush1.msra.mxu0 %v25
  %186 = vmatprep.subr.mxu0 0.0
  %187 = vmatpush1.msra.mxu0 %v26
  %188 = vmatprep.subr.mxu0 0.0
  %189 = vmatpush1.msra.mxu0 %v27
  %190 = vmatprep.subr.mxu0 0.0
  %191 = vmatpush1.msra.mxu0 %v28
  %192 = vmatprep.subr.mxu0 0.0
  %193 = vmatpush1.msra.mxu0 %v29
  %194 = vmatprep.subr.mxu0 0.0
  %195 = vmatpush1.msra.mxu0 %v30
  %196 = vmatprep.subr.mxu0 0.0
  %197 = vmatpush1.msra.mxu0 %v31
  %198 = vmatprep.subr.mxu0 0.0
  %199 = vmatpush1.msra.mxu0 %v32
  %200 = vmatprep.subr.mxu0 0.0
  %201 = vmatpush1.msra.mxu0 %v33
  %202 = vmatprep.subr.mxu0 0.0
  %203 = vmatpush1.msra.mxu0 %v34
  %204 = vmatprep.subr.mxu0 0.0
  %205 = vmatpush1.msra.mxu0 %v35
  %206 = vmatprep.subr.mxu0 0.0
  %207 = vmatpush1.msra.mxu0 %v36
  %208 = vmatprep.subr.mxu0 0.0
  %209 = vmatpush1.msra.mxu0 %v37
  %210 = vmatprep.subr.mxu0 0.0
  %211 = vmatpush1.msra.mxu0 %v38
  %212 = vmatprep.subr.mxu0 0.0
  %213 = vmatpush1.msra.mxu0 %v39
  %214 = vmatprep.subr.mxu0 0.0
  %215 = vmatpush1.msra.mxu0 %v40
  %216 = vmatprep.subr.mxu0 0.0
  %217 = vmatpush1.msra.mxu0 %v41
  %218 = vmatprep.subr.mxu0 0.0
  %219 = vmatpush1.msra.mxu0 %v42
  %220 = vmatprep.subr.mxu0 0.0
  %221 = vmatpush1.msra.mxu0 %v43
  %222 = vmatprep.subr.mxu0 0.0
  %223 = vmatpush1.msra.mxu0 %v44
  %224 = vmatprep.subr.mxu0 0.0
  %225 = vmatpush1.msra.mxu0 %v45
  %226 = vmatprep.subr.mxu0 0.0
  %227 = vmatpush1.msra.mxu0 %v46
  %228 = vmatprep.subr.mxu0 0.0
  %229 = vmatpush1.msra.mxu0 %v47
  %230 = vmatprep.mubr.f32.mxu0 %v138
  %231 = vmatmul.mubr.f32.gmra.mrb[0].mxu0 %v134
  %v232 = vpop.f32.mrb[0].mxu0
  %v233 = vadd.f32 %v129, %v232
  %v234 = vpop.f32.mrb[0].mxu0
  %235 = vdwg.mxu0
  %236 = vmatprep.subr.mxu0 0.0
  %237 = vmatpush1.msra.mxu0 %v48
  %238 = vmatprep.subr.mxu0 0.0
  %239 = vmatpush1.msra.mxu0 %v49
  %240 = vmatprep.subr.mxu0 0.0
  %241 = vmatpush1.msra.mxu0 %v50
  %242 = vmatprep.subr.mxu0 0.0
  %243 = vmatpush1.msra.mxu0 %v51
  %244 = vmatprep.subr.mxu0 0.0
  %245 = vmatpush1.msra.mxu0 %v52
  %246 = vmatprep.subr.mxu0 0.0
  %247 = vmatpush1.msra.mxu0 %v53
  %248 = vmatprep.subr.mxu0 0.0
  %249 = vmatpush1.msra.mxu0 %v54
  %250 = vmatprep.subr.mxu0 0.0
  %251 = vmatpush1.msra.mxu0 %v55
  %252 = vmatprep.subr.mxu0 0.0
  %253 = vmatpush1.msra.mxu0 %v56
  %254 = vmatprep.subr.mxu0 0.0
  %255 = vmatpush1.msra.mxu0 %v57
  %256 = vmatprep.subr.mxu0 0.0
  %257 = vmatpush1.msra.mxu0 %v58
  %258 = vmatprep.subr.mxu0 0.0
  %259 = vmatpush1.msra.mxu0 %v59
  %260 = vmatprep.subr.mxu0 0.0
  %261 = vmatpush1.msra.mxu0 %v60
  %262 = vmatprep.subr.mxu0 0.0
  %263 = vmatpush1.msra.mxu0 %v61
  %264 = vmatprep.subr.mxu0 0.0
  %265 = vmatpush1.msra.mxu0 %v62
  %266 = vmatprep.subr.mxu0 0.0
  %267 = vmatpush1.msra.mxu0 %v63
  %268 = vmatprep.subr.mxu0 0.0
  %269 = vmatpush1.msra.mxu0 %v64
  %270 = vmatprep.subr.mxu0 0.0
  %271 = vmatpush1.msra.mxu0 %v65
  %272 = vmatprep.subr.mxu0 0.0
  %273 = vmatpush1.msra.mxu0 %v66
  %274 = vmatprep.subr.mxu0 0.0
  %275 = vmatpush1.msra.mxu0 %v67
  %276 = vmatprep.subr.mxu0 0.0
  %277 = vmatpush1.msra.mxu0 %v68
  %278 = vmatprep.subr.mxu0 0.0
  %279 = vmatpush1.msra.mxu0 %v69
  %280 = vmatprep.subr.mxu0 0.0
  %281 = vmatpush1.msra.mxu0 %v70
  %282 = vmatprep.subr.mxu0 0.0
  %283 = vmatpush1.msra.mxu0 %v71
  %284 = vmatprep.subr.mxu0 0.0
  %285 = vmatpush1.msra.mxu0 %v72
  %286 = vmatprep.subr.mxu0 0.0
  %287 = vmatpush1.msra.mxu0 %v73
  %288 = vmatprep.subr.mxu0 0.0
  %289 = vmatpush1.msra.mxu0 %v74
  %290 = vmatprep.subr.mxu0 0.0
  %291 = vmatpush1.msra.mxu0 %v75
  %292 = vmatprep.subr.mxu0 0.0
  %293 = vmatpush1.msra.mxu0 %v76
  %294 = vmatprep.subr.mxu0 0.0
  %295 = vmatpush1.msra.mxu0 %v77
  %296 = vmatprep.subr.mxu0 0.0
  %297 = vmatpush1.msra.mxu0 %v78
  %298 = vmatprep.subr.mxu0 0.0
  %299 = vmatpush1.msra.mxu0 %v79
  %300 = vmatprep.mubr.f32.mxu0 %v146
  %301 = vmatmul.mubr.f32.gmra.mrb[0].mxu0 %v142
  %v302 = vpop.f32.mrb[0].mxu0
  %v303 = vadd.f32 %v233, %v302
  %v304 = vpop.f32.mrb[0].mxu0
  %305 = vdwg.mxu0
  %306 = vmatprep.subr.mxu0 0.0
  %307 = vmatpush1.msra.mxu0 %v80
  %308 = vmatprep.subr.mxu0 0.0
  %309 = vmatpush1.msra.mxu0 %v81
  %310 = vmatprep.subr.mxu0 0.0
  %311 = vmatpush1.msra.mxu0 %v82
  %312 = vmatprep.subr.mxu0 0.0
  %313 = vmatpush1.msra.mxu0 %v83
  %314 = vmatprep.subr.mxu0 0.0
  %315 = vmatpush1.msra.mxu0 %v84
  %316 = vmatprep.subr.mxu0 0.0
  %317 = vmatpush1.msra.mxu0 %v85
  %318 = vmatprep.subr.mxu0 0.0
  %319 = vmatpush1.msra.mxu0 %v86
  %320 = vmatprep.subr.mxu0 0.0
  %321 = vmatpush1.msra.mxu0 %v87
  %322 = vmatprep.subr.mxu0 0.0
  %323 = vmatpush1.msra.mxu0 %v88
  %324 = vmatprep.subr.mxu0 0.0
  %325 = vmatpush1.msra.mxu0 %v89
  %326 = vmatprep.subr.mxu0 0.0
  %327 = vmatpush1.msra.mxu0 %v90
  %328 = vmatprep.subr.mxu0 0.0
  %329 = vmatpush1.msra.mxu0 %v91
  %330 = vmatprep.subr.mxu0 0.0
  %331 = vmatpush1.msra.mxu0 %v92
  %332 = vmatprep.subr.mxu0 0.0
  %333 = vmatpush1.msra.mxu0 %v93
  %334 = vmatprep.subr.mxu0 0.0
  %335 = vmatpush1.msra.mxu0 %v94
  %336 = vmatprep.subr.mxu0 0.0
  %337 = vmatpush1.msra.mxu0 %v95
  %338 = vmatprep.subr.mxu0 0.0
  %339 = vmatpush1.msra.mxu0 %v96
  %340 = vmatprep.subr.mxu0 0.0
  %341 = vmatpush1.msra.mxu0 %v97
  %342 = vmatprep.subr.mxu0 0.0
  %343 = vmatpush1.msra.mxu0 %v98
  %344 = vmatprep.subr.mxu0 0.0
  %345 = vmatpush1.msra.mxu0 %v99
  %346 = vmatprep.subr.mxu0 0.0
  %347 = vmatpush1.msra.mxu0 %v100
  %348 = vmatprep.subr.mxu0 0.0
  %349 = vmatpush1.msra.mxu0 %v101
  %350 = vmatprep.subr.mxu0 0.0
  %351 = vmatpush1.msra.mxu0 %v102
  %352 = vmatprep.subr.mxu0 0.0
  %353 = vmatpush1.msra.mxu0 %v103
  %354 = vmatprep.subr.mxu0 0.0
  %355 = vmatpush1.msra.mxu0 %v104
  %356 = vmatprep.subr.mxu0 0.0
  %357 = vmatpush1.msra.mxu0 %v105
  %358 = vmatprep.subr.mxu0 0.0
  %359 = vmatpush1.msra.mxu0 %v106
  %360 = vmatprep.subr.mxu0 0.0
  %361 = vmatpush1.msra.mxu0 %v107
  %362 = vmatprep.subr.mxu0 0.0
  %363 = vmatpush1.msra.mxu0 %v108
  %364 = vmatprep.subr.mxu0 0.0
  %365 = vmatpush1.msra.mxu0 %v109
  %366 = vmatprep.subr.mxu0 0.0
  %367 = vmatpush1.msra.mxu0 %v110
  %368 = vmatprep.subr.mxu0 0.0
  %369 = vmatpush1.msra.mxu0 %v111
  %370 = vmatprep.mubr.f32.mxu0 %v154
  %371 = vmatmul.mubr.f32.gmra.mrb[0].mxu0 %v150
  %v372 = vpop.f32.mrb[0].mxu0
  %v373 = vadd.f32 %v303, %v372
  %v374 = vpop.f32.mrb[0].mxu0
  %375 = vdwg.mxu0
  %376 = vmatprep.subr.mxu0 0.0
  %377 = vmatpush1.msra.mxu0 %v112
  %378 = vmatprep.subr.mxu0 0.0
  %379 = vmatpush1.msra.mxu0 %v113
  %380 = vmatprep.subr.mxu0 0.0
  %381 = vmatpush1.msra.mxu0 %v114
  %382 = vmatprep.subr.mxu0 0.0
  %383 = vmatpush1.msra.mxu0 %v115
  %384 = vmatprep.subr.mxu0 0.0
  %385 = vmatpush1.msra.mxu0 %v116
  %386 = vmatprep.subr.mxu0 0.0
  %387 = vmatpush1.msra.mxu0 %v117
  %388 = vmatprep.subr.mxu0 0.0
  %389 = vmatpush1.msra.mxu0 %v118
  %390 = vmatprep.subr.mxu0 0.0
  %391 = vmatpush1.msra.mxu0 %v119
  %392 = vmatprep.subr.mxu0 0.0
  %393 = vmatpush1.msra.mxu0 %v120
  %394 = vmatprep.subr.mxu0 0.0
  %395 = vmatpush1.msra.mxu0 %v121
  %396 = vmatprep.subr.mxu0 0.0
  %397 = vmatpush1.msra.mxu0 %v122
  %398 = vmatprep.subr.mxu0 0.0
  %399 = vmatpush1.msra.mxu0 %v123
  %400 = vmatprep.subr.mxu0 0.0
  %401 = vmatpush1.msra.mxu0 %v124
  %402 = vmatprep.subr.mxu0 0.0
  %403 = vmatpush1.msra.mxu0 %v125
  %404 = vmatprep.subr.mxu0 0.0
  %405 = vmatpush1.msra.mxu0 %v126
  %406 = vmatprep.subr.mxu0 0.0
  %407 = vmatpush1.msra.mxu0 %v127
  %408 = vmatprep.subr.mxu0 0.0
  %409 = vmatpush1.msra.mxu0 0.0
  %410 = vmatprep.subr.mxu0 0.0
  %411 = vmatpush1.msra.mxu0 0.0
  %412 = vmatprep.subr.mxu0 0.0
  %413 = vmatpush1.msra.mxu0 0.0
  %414 = vmatprep.subr.mxu0 0.0
  %415 = vmatpush1.msra.mxu0 0.0
  %416 = vmatprep.subr.mxu0 0.0
  %417 = vmatpush1.msra.mxu0 0.0
  %418 = vmatprep.subr.mxu0 0.0
  %419 = vmatpush1.msra.mxu0 0.0
  %420 = vmatprep.subr.mxu0 0.0
  %421 = vmatpush1.msra.mxu0 0.0
  %422 = vmatprep.subr.mxu0 0.0
  %423 = vmatpush1.msra.mxu0 0.0
  %424 = vmatprep.subr.mxu0 0.0
  %425 = vmatpush1.msra.mxu0 0.0
  %426 = vmatprep.subr.mxu0 0.0
  %427 = vmatpush1.msra.mxu0 0.0
  %428 = vmatprep.subr.mxu0 0.0
  %429 = vmatpush1.msra.mxu0 0.0
  %430 = vmatprep.subr.mxu0 0.0
  %431 = vmatpush1.msra.mxu0 0.0
  %432 = vmatprep.subr.mxu0 0.0
  %433 = vmatpush1.msra.mxu0 0.0
  %434 = vmatprep.subr.mxu0 0.0
  %435 = vmatpush1.msra.mxu0 0.0
  %436 = vmatprep.subr.mxu0 0.0
  %437 = vmatpush1.msra.mxu0 0.0
  %438 = vmatprep.subr.mxu0 0.0
  %439 = vmatpush1.msra.mxu0 0.0
  %440 = vmatprep.mubr.f32.mxu0 0.0
  %441 = vmatmul.mubr.f32.gmra.mrb[0].mxu0 %v158
  %v442 = vpop.f32.mrb[0].mxu0
  %v443 = vadd.f32 %v373, %v442
  %v444 = vpop.f32.mrb[0].mxu0
  %445 = vdwg.mxu0
  %v446 = vxor.u32 %v443, 2147483648
  %v447 = vmul.f32 %v446, 1.442695
  %v448 = vpow.pop %v447
  %v449 = vadd.f32 %v448, 1.0
  %v450 = vrcp.pop %v449
  %v451 = vmul.f32 1.0, %v450
  %vm452 = vcmask 516096
  %453 = vst.msk [vmem:[%s3] sm:$0x1] %vm452, %v451
  // Predicated region
  $region14: #{mlp_forward.1} parent=0 // pred_check
    _
  $region15: #{mlp_forward.1} parent=0 // pred_check_branch
    %455 = sbr.rel (0) target = $region17
  $region16: #{mlp_forward.1} parent=0 // pred_region
    _
  $region17: #{mlp_forward.1} parent=0 // pred_fallthru
    _
  // Predicated region
  $region18: #{mlp_forward.1} parent=0 // pred_check
    _
  $region19: #{mlp_forward.1} parent=0 // pred_check_branch
    %457 = sbr.rel (0) target = $region21
  $region20: #{mlp_forward.1} parent=0 // pred_region
    _
  $region21: #{mlp_forward.1} parent=0 // pred_fallthru
    _

</llo_original>
